<compile_context>
chip_gen: v6e
topology: v6e:2x2x1
jax: 0.10.0
libtpu: 0.0.40
codegen_flags: <defaults>
</compile_context>

<pallas_src>
import functools

import jax
import jax.numpy as jnp
import numpy as np
from jax.experimental import pallas as pl
from jax.experimental.pallas import tpu as pltpu


def _fis_kernel(x_ref, a_ref, o_ref, *, T, Rp, N, TB, semiring):
    """x_ref: (TB, C, T) proj dtype; a_ref: (N*Rp, C) proj dtype; o_ref: (1, Rp, TB) f32."""
    xb = x_ref[...]                       # (TB, C, T)  -- one batch tile, native NCL layout
    A = a_ref[...]                        # (N*Rp, C), row n*Rp + r = alpha_{tree r, node n}
    C = A.shape[-1]

    # Hot path (MXU): one batched matmul per grid step,
    #   P[b, n*Rp + r, t] = <alpha_{r,n}, x[b, :, t]>,
    # bf16 (or f32) operands, f32 accumulation, time T on the lane axis.
    A_b = jnp.broadcast_to(A[None], (TB, N * Rp, C))
    P = jax.lax.dot_general(
        A_b, xb,
        dimension_numbers=(((2,), (1,)), ((0,), (0,))),
        preferred_element_type=jnp.float32)           # (TB, N*Rp, T) f32

    if semiring == "real":
        unit = jnp.float32(0.0)
        combine = jnp.add
    elif semiring == "arctic":
        unit = jnp.float32(-jnp.inf)                  # true identity under max / +
        combine = jnp.maximum
    else:
        raise ValueError(f"unsupported semiring: {semiring}")

    t_idx = jax.lax.broadcasted_iota(jnp.int32, (1, 1, T), 2)
    mask_cache = {}

    def lt_mask(d):
        # Cache the (1, 1, T) compare so it is traced once per distinct shift.
        if d not in mask_cache:
            mask_cache[d] = t_idx < d
        return mask_cache[d]

    def shift_right(v, d):
        # v shifted by d along time (lane axis); positions t < d take the identity.
        return jnp.where(lt_mask(d), unit, pltpu.roll(v, shift=d, axis=2))

    def exclusive_scan(v):
        # Hillis-Steele inclusive scan of the one-step-shifted array:
        # O(log2 T) roll + combine steps on VPU/XLU, no (T, T) operator, no O(T^2) work.
        acc = shift_right(v, 1)
        d = 1
        while d < T:
            acc = combine(acc, shift_right(acc, d))
            d *= 2
        return acc

    z = P[:, 0:Rp, :]                                  # (TB, Rp, T)
    for n in range(1, N):
        Pn = P[:, n * Rp:(n + 1) * Rp, :]              # Rp % 8 == 0 -> aligned free view
        Z = exclusive_scan(z)
        z = Pn * Z if semiring == "real" else Pn + Z

    if semiring == "real":
        out = jnp.sum(z, axis=-1)                      # (TB, Rp) lane reduce
    else:
        out = jnp.max(z, axis=-1)

    # Lane-dense store: the batch tile sits on the lane axis of the output block.
    o_ref[0] = jnp.transpose(out).astype(o_ref.dtype)  # (Rp, TB)


@functools.partial(jax.jit,
                   static_argnames=("semiring", "proj_dtype", "max_batch_block"))
def fis_forward(x, alphas, semiring="real", proj_dtype=jnp.bfloat16,
                max_batch_block=None):
    """x: (B, C, T) (PyTorch NCL layout); alphas: (num_trees, num_nodes, C)."""
    B, C, T = x.shape
    R, N, _ = alphas.shape
    if semiring not in ("real", "arctic"):
        raise ValueError(f"unsupported semiring: {semiring}")

    pbytes = jnp.dtype(proj_dtype).itemsize
    Rp = pl.cdiv(R, 8) * 8       # pad trees to a sublane tile: per-node slices stay aligned

    # ---- Generation-aware VMEM budget & batch-tile selection -------------------
    try:
        vmem_cap = int(getattr(pltpu.get_tpu_info(), "vmem_capacity_bytes", 0)) or (64 << 20)
    except Exception:  # pragma: no cover - info query unavailable
        vmem_cap = 64 << 20      # v7x floor; v5e / v6e actually have 128 MiB
    budget = int(0.55 * vmem_cap)  # headroom for compiler scratch / pipelining

    per_tb = (2 * C * T * pbytes           # x block, double-buffered
              + N * Rp * C * pbytes        # broadcast alpha copy fed to the batched matmul
              + (N + 6) * Rp * T * 4       # P + live f32 scan temporaries
              + 2 * Rp * 4)                # output block, double-buffered
    fixed = 2 * N * Rp * C * pbytes + 4 * T  # resident alpha slab + iota
    tb = int(max(1, min(B, (budget - fixed) // per_tb, 256)))
    if max_batch_block is not None:
        tb = max(1, min(tb, int(max_batch_block)))
    if tb >= B and B >= 16:
        tb = pl.cdiv(B, 2)       # >= 2 grid steps so both v7x TensorCores get work

    G = pl.cdiv(B, tb)
    Bp = G * tb

    est = fixed + tb * per_tb
    vmem_limit = int(min(vmem_cap, max(est + est // 4 + (1 << 20), 32 << 20)))

    # ---- Operand prep -----------------------------------------------------------
    # Weight slab, node-major / tree-minor rows: A[n*Rp + r, :] = alphas[r, n, :].
    A = jnp.transpose(alphas.astype(jnp.float32), (1, 0, 2))     # (N, R, C)
    if Rp != R:
        A = jnp.pad(A, ((0, 0), (0, Rp - R), (0, 0)))
    A = A.reshape(N * Rp, C).astype(proj_dtype)

    # bf16 matmul operands halve x's HBM read; accumulation and all scan math stay f32.
    x = x.astype(proj_dtype)
    if Bp != B:
        x = jnp.pad(x, ((0, Bp - B), (0, 0), (0, 0)))            # pad batch to a tile multiple

    kernel = functools.partial(_fis_kernel, T=T, Rp=Rp, N=N, TB=tb, semiring=semiring)

    out = pl.pallas_call(
        kernel,
        out_shape=jax.ShapeDtypeStruct((G, Rp, tb), jnp.float32),
        grid=(G,),
        in_specs=[
            pl.BlockSpec((tb, C, T), lambda g: (g, 0, 0)),       # TB batch elements per step
            pl.BlockSpec((N * Rp, C), lambda g: (0, 0)),         # weight slab resident
        ],
        out_specs=pl.BlockSpec((1, Rp, tb), lambda g: (g, 0, 0)),  # lane-dense (Rp, TB) block
        compiler_params=pltpu.CompilerParams(
            dimension_semantics=("parallel",),
            vmem_limit_bytes=vmem_limit,
        ),
    )(x, A)

    # (G, Rp, TB) -> (B, num_trees); tiny wrapper-side reshuffle of the result only.
    return jnp.transpose(out, (0, 2, 1)).reshape(Bp, Rp)[:B, :R]


def fis_reference(x, alphas, semiring):
    """Pure-JAX f32 reference for correctness checking."""
    P = jnp.einsum("rnc,bct->brnt", alphas, x)                   # (B, R, N, T)
    N = alphas.shape[1]
    z = P[:, :, 0, :]                                            # (B, R, T)
    if semiring == "real":
        for n in range(1, N):
            inc = jnp.cumsum(z, axis=2)
            Z = jnp.concatenate([jnp.zeros_like(inc[:, :, :1]), inc[:, :, :-1]], axis=2)
            z = P[:, :, n, :] * Z
        return z.sum(-1)
    for n in range(1, N):
        inc = jax.lax.cummax(z, axis=2)
        Z = jnp.concatenate([jnp.full_like(inc[:, :, :1], -jnp.inf), inc[:, :, :-1]], axis=2)
        z = P[:, :, n, :] + Z
    return z.max(-1)


if __name__ == "__main__":
    # Small shapes consistent with the module: batch=2, in_channels=4, seq=16,
    # num_trees=8, num_nodes=3.
    B, C, T = 2, 4, 16
    num_trees, num_nodes = 8, 3

    key = jax.random.PRNGKey(0)
    kx, ka, kx2, ka2 = jax.random.split(key, 4)
    x = jax.random.normal(kx, (B, C, T), dtype=jnp.float32)
    # ParamInit.NORMAL: one randn(in_channels) vector per tree node.
    alphas = jax.random.normal(ka, (num_trees, num_nodes, C), dtype=jnp.float32)

    # 1) Exact-path check (f32 projection) against the reference.
    for semiring in ("real", "arctic"):
        out = jax.block_until_ready(
            fis_forward(x, alphas, semiring=semiring, proj_dtype=jnp.float32))
        ref = fis_reference(x, alphas, semiring)
        np.testing.assert_allclose(np.asarray(out), np.asarray(ref), rtol=1e-4, atol=1e-4)
        assert out.shape == (B, num_trees)

    # 2) Default bf16-projection path: compare against the reference evaluated on
    #    identically bf16-rounded inputs (accumulation stays f32 in both).
    x_r = x.astype(jnp.bfloat16).astype(jnp.float32)
    a_r = alphas.astype(jnp.bfloat16).astype(jnp.float32)
    for semiring in ("real", "arctic"):
        out = jax.block_until_ready(fis_forward(x, alphas, semiring=semiring))
        ref = fis_reference(x_r, a_r, semiring)
        np.testing.assert_allclose(np.asarray(out), np.asarray(ref), rtol=1e-3, atol=1e-3)
        assert out.shape == (B, num_trees)

    # 3) Coverage for cross-vreg lane rolls (T > 128), non-multiple-of-8 tree counts,
    #    a multi-step batch-tiled grid and batch padding (B=6 with TB=4 -> grid of 2).
    B2, C2, T2 = 6, 8, 256
    trees2, nodes2 = 5, 4
    x2 = jax.random.normal(kx2, (B2, C2, T2), dtype=jnp.float32)
    al2 = jax.random.normal(ka2, (trees2, nodes2, C2), dtype=jnp.float32)
    for semiring in ("real", "arctic"):
        out = jax.block_until_ready(
            fis_forward(x2, al2, semiring=semiring, proj_dtype=jnp.float32,
                        max_batch_block=4))
        ref = fis_reference(x2, al2, semiring)
        tol = 1e-4 * max(1.0, float(jnp.max(jnp.abs(ref))))
        np.testing.assert_allclose(np.asarray(out), np.asarray(ref), rtol=1e-3, atol=tol)
        assert out.shape == (B2, trees2)

    print("KERNEL_OK")
</pallas_src>

<mosaic_0001>
module attributes {stable_mosaic.version = 11 : i64} {
  func.func @_fis_kernel(%arg0: i32, %arg1: memref<2x4x16xf32, #tpu.memory_space<vmem>>, %arg2: memref<24x4xf32, #tpu.memory_space<vmem>>, %arg3: memref<1x8x2xf32, #tpu.memory_space<vmem>>) attributes {dimension_semantics = [#tpu.dimension_semantics<parallel>], iteration_bounds = array<i64: 1>, scalar_prefetch = 0 : i64, scratch_operands = 0 : i64, tpu.core_type = #tpu.core_type<tc>, window_params = [{transform_indices = @transform_0, window_bounds = array<i64: 2, 4, 16>}, {pipeline_mode = #tpu.pipeline_mode<synchronous>, transform_indices = @transform_1, window_bounds = array<i64: 24, 4>}, {transform_indices = @transform_2, window_bounds = array<i64: 1, 8, 2>}]} {
    %c0 = arith.constant 0 : index
    %c0_0 = arith.constant 0 : index
    %c0_1 = arith.constant 0 : index
    %0 = vector.load %arg1[%c0, %c0_0, %c0_1] : memref<2x4x16xf32, #tpu.memory_space<vmem>>, vector<2x4x16xf32>
    %c0_2 = arith.constant 0 : index
    %c0_3 = arith.constant 0 : index
    %1 = vector.load %arg2[%c0_2, %c0_3] : memref<24x4xf32, #tpu.memory_space<vmem>>, vector<24x4xf32>
    %2 = vector.shape_cast %1 : vector<24x4xf32> to vector<1x24x4xf32>
    %3 = vector.shape_cast %2 : vector<1x24x4xf32> to vector<1x24x4xf32>
    %4 = vector.broadcast %3 : vector<1x24x4xf32> to vector<2x24x4xf32>
    %cst = arith.constant dense<0.000000e+00> : vector<2x24x16xf32>
    %5 = tpu.matmul %4, %0, %cst {dimension_numbers = #tpu.dot_dimension_numbers<[2], [1], [1], [2], [0, 0, 0, 1, 1, 2], [0], [0]>} : vector<2x24x4xf32>, vector<2x4x16xf32>, vector<2x24x16xf32> -> vector<2x24x16xf32>
    %6 = tpu.iota {dimensions = array<i32: 2>} : vector<1x1x16xi32>
    %7 = vector.extract_strided_slice %5 {offsets = [0, 0, 0], sizes = [2, 8, 16], strides = [1, 1, 1]} : vector<2x24x16xf32> to vector<2x8x16xf32>
    %8 = vector.extract_strided_slice %5 {offsets = [0, 8, 0], sizes = [2, 8, 16], strides = [1, 1, 1]} : vector<2x24x16xf32> to vector<2x8x16xf32>
    %c1_i32 = arith.constant 1 : i32
    %9 = vector.broadcast %c1_i32 : i32 to vector<1x1x16xi32>
    %10 = arith.cmpi slt, %6, %9 : vector<1x1x16xi32>
    %c1_i32_4 = arith.constant 1 : i32
    %11 = tpu.dynamic_rotate %7 by %c1_i32_4 dim 2 : vector<2x8x16xf32>, i32 -> vector<2x8x16xf32>
    %cst_5 = arith.constant 0.000000e+00 : f32
    %12 = vector.shape_cast %10 : vector<1x1x16xi1> to vector<1x1x16xi1>
    %13 = vector.broadcast %12 : vector<1x1x16xi1> to vector<2x8x16xi1>
    %14 = vector.broadcast %cst_5 : f32 to vector<2x8x16xf32>
    %15 = arith.select %13, %14, %11 : vector<2x8x16xi1>, vector<2x8x16xf32>
    %c1_i32_6 = arith.constant 1 : i32
    %16 = tpu.dynamic_rotate %15 by %c1_i32_6 dim 2 : vector<2x8x16xf32>, i32 -> vector<2x8x16xf32>
    %cst_7 = arith.constant 0.000000e+00 : f32
    %17 = vector.shape_cast %10 : vector<1x1x16xi1> to vector<1x1x16xi1>
    %18 = vector.broadcast %17 : vector<1x1x16xi1> to vector<2x8x16xi1>
    %19 = vector.broadcast %cst_7 : f32 to vector<2x8x16xf32>
    %20 = arith.select %18, %19, %16 : vector<2x8x16xi1>, vector<2x8x16xf32>
    %21 = arith.addf %15, %20 : vector<2x8x16xf32>
    %c2_i32 = arith.constant 2 : i32
    %22 = vector.broadcast %c2_i32 : i32 to vector<1x1x16xi32>
    %23 = arith.cmpi slt, %6, %22 : vector<1x1x16xi32>
    %c2_i32_8 = arith.constant 2 : i32
    %24 = tpu.dynamic_rotate %21 by %c2_i32_8 dim 2 : vector<2x8x16xf32>, i32 -> vector<2x8x16xf32>
    %cst_9 = arith.constant 0.000000e+00 : f32
    %25 = vector.shape_cast %23 : vector<1x1x16xi1> to vector<1x1x16xi1>
    %26 = vector.broadcast %25 : vector<1x1x16xi1> to vector<2x8x16xi1>
    %27 = vector.broadcast %cst_9 : f32 to vector<2x8x16xf32>
    %28 = arith.select %26, %27, %24 : vector<2x8x16xi1>, vector<2x8x16xf32>
    %29 = arith.addf %21, %28 : vector<2x8x16xf32>
    %c4_i32 = arith.constant 4 : i32
    %30 = vector.broadcast %c4_i32 : i32 to vector<1x1x16xi32>
    %31 = arith.cmpi slt, %6, %30 : vector<1x1x16xi32>
    %c4_i32_10 = arith.constant 4 : i32
    %32 = tpu.dynamic_rotate %29 by %c4_i32_10 dim 2 : vector<2x8x16xf32>, i32 -> vector<2x8x16xf32>
    %cst_11 = arith.constant 0.000000e+00 : f32
    %33 = vector.shape_cast %31 : vector<1x1x16xi1> to vector<1x1x16xi1>
    %34 = vector.broadcast %33 : vector<1x1x16xi1> to vector<2x8x16xi1>
    %35 = vector.broadcast %cst_11 : f32 to vector<2x8x16xf32>
    %36 = arith.select %34, %35, %32 : vector<2x8x16xi1>, vector<2x8x16xf32>
    %37 = arith.addf %29, %36 : vector<2x8x16xf32>
    %c8_i32 = arith.constant 8 : i32
    %38 = vector.broadcast %c8_i32 : i32 to vector<1x1x16xi32>
    %39 = arith.cmpi slt, %6, %38 : vector<1x1x16xi32>
    %c8_i32_12 = arith.constant 8 : i32
    %40 = tpu.dynamic_rotate %37 by %c8_i32_12 dim 2 : vector<2x8x16xf32>, i32 -> vector<2x8x16xf32>
    %cst_13 = arith.constant 0.000000e+00 : f32
    %41 = vector.shape_cast %39 : vector<1x1x16xi1> to vector<1x1x16xi1>
    %42 = vector.broadcast %41 : vector<1x1x16xi1> to vector<2x8x16xi1>
    %43 = vector.broadcast %cst_13 : f32 to vector<2x8x16xf32>
    %44 = arith.select %42, %43, %40 : vector<2x8x16xi1>, vector<2x8x16xf32>
    %45 = arith.addf %37, %44 : vector<2x8x16xf32>
    %46 = arith.mulf %8, %45 : vector<2x8x16xf32>
    %47 = vector.extract_strided_slice %5 {offsets = [0, 16, 0], sizes = [2, 8, 16], strides = [1, 1, 1]} : vector<2x24x16xf32> to vector<2x8x16xf32>
    %c1_i32_14 = arith.constant 1 : i32
    %48 = tpu.dynamic_rotate %46 by %c1_i32_14 dim 2 : vector<2x8x16xf32>, i32 -> vector<2x8x16xf32>
    %cst_15 = arith.constant 0.000000e+00 : f32
    %49 = vector.shape_cast %10 : vector<1x1x16xi1> to vector<1x1x16xi1>
    %50 = vector.broadcast %49 : vector<1x1x16xi1> to vector<2x8x16xi1>
    %51 = vector.broadcast %cst_15 : f32 to vector<2x8x16xf32>
    %52 = arith.select %50, %51, %48 : vector<2x8x16xi1>, vector<2x8x16xf32>
    %c1_i32_16 = arith.constant 1 : i32
    %53 = tpu.dynamic_rotate %52 by %c1_i32_16 dim 2 : vector<2x8x16xf32>, i32 -> vector<2x8x16xf32>
    %cst_17 = arith.constant 0.000000e+00 : f32
    %54 = vector.shape_cast %10 : vector<1x1x16xi1> to vector<1x1x16xi1>
    %55 = vector.broadcast %54 : vector<1x1x16xi1> to vector<2x8x16xi1>
    %56 = vector.broadcast %cst_17 : f32 to vector<2x8x16xf32>
    %57 = arith.select %55, %56, %53 : vector<2x8x16xi1>, vector<2x8x16xf32>
    %58 = arith.addf %52, %57 : vector<2x8x16xf32>
    %c2_i32_18 = arith.constant 2 : i32
    %59 = tpu.dynamic_rotate %58 by %c2_i32_18 dim 2 : vector<2x8x16xf32>, i32 -> vector<2x8x16xf32>
    %cst_19 = arith.constant 0.000000e+00 : f32
    %60 = vector.shape_cast %23 : vector<1x1x16xi1> to vector<1x1x16xi1>
    %61 = vector.broadcast %60 : vector<1x1x16xi1> to vector<2x8x16xi1>
    %62 = vector.broadcast %cst_19 : f32 to vector<2x8x16xf32>
    %63 = arith.select %61, %62, %59 : vector<2x8x16xi1>, vector<2x8x16xf32>
    %64 = arith.addf %58, %63 : vector<2x8x16xf32>
    %c4_i32_20 = arith.constant 4 : i32
    %65 = tpu.dynamic_rotate %64 by %c4_i32_20 dim 2 : vector<2x8x16xf32>, i32 -> vector<2x8x16xf32>
    %cst_21 = arith.constant 0.000000e+00 : f32
    %66 = vector.shape_cast %31 : vector<1x1x16xi1> to vector<1x1x16xi1>
    %67 = vector.broadcast %66 : vector<1x1x16xi1> to vector<2x8x16xi1>
    %68 = vector.broadcast %cst_21 : f32 to vector<2x8x16xf32>
    %69 = arith.select %67, %68, %65 : vector<2x8x16xi1>, vector<2x8x16xf32>
    %70 = arith.addf %64, %69 : vector<2x8x16xf32>
    %c8_i32_22 = arith.constant 8 : i32
    %71 = tpu.dynamic_rotate %70 by %c8_i32_22 dim 2 : vector<2x8x16xf32>, i32 -> vector<2x8x16xf32>
    %cst_23 = arith.constant 0.000000e+00 : f32
    %72 = vector.shape_cast %39 : vector<1x1x16xi1> to vector<1x1x16xi1>
    %73 = vector.broadcast %72 : vector<1x1x16xi1> to vector<2x8x16xi1>
    %74 = vector.broadcast %cst_23 : f32 to vector<2x8x16xf32>
    %75 = arith.select %73, %74, %71 : vector<2x8x16xi1>, vector<2x8x16xf32>
    %76 = arith.addf %70, %75 : vector<2x8x16xf32>
    %77 = arith.mulf %47, %76 : vector<2x8x16xf32>
    %cst_24 = arith.constant dense<0.000000e+00> : vector<2x8xf32>
    %78 = vector.multi_reduction <add>, %77, %cst_24 [2] : vector<2x8x16xf32> to vector<2x8xf32>
    %79 = tpu.transpose %78, [1, 0] : vector<2x8xf32> -> vector<8x2xf32>
    %c0_25 = arith.constant 0 : index
    %c0_26 = arith.constant 0 : index
    %c0_27 = arith.constant 0 : index
    %80 = vector.load %arg3[%c0_25, %c0_26, %c0_27] : memref<1x8x2xf32, #tpu.memory_space<vmem>>, vector<1x8x2xf32>
    %81 = vector.shape_cast %80 : vector<1x8x2xf32> to vector<8x2xf32>
    %82 = vector.shape_cast %79 : vector<8x2xf32> to vector<1x8x2xf32>
    tpu.vector_store %arg3[%c0_25, %c0_26, %c0_27], %82 {strides = array<i32>} : memref<1x8x2xf32, #tpu.memory_space<vmem>>, vector<1x8x2xf32>,
    return
  }
  func.func @transform_0(%arg0: i32) -> (i32, i32, i32) {
    %c0_i32 = arith.constant 0 : i32
    %c0_i32_0 = arith.constant 0 : i32
    %c0_i32_1 = arith.constant 0 : i32
    return %arg0, %c0_i32, %c0_i32_0 : i32, i32, i32
  }
  func.func @transform_1(%arg0: i32) -> (i32, i32) {
    %c0_i32 = arith.constant 0 : i32
    %c0_i32_0 = arith.constant 0 : i32
    %c0_i32_1 = arith.constant 0 : i32
    return %c0_i32, %c0_i32_0 : i32, i32
  }
  func.func @transform_2(%arg0: i32) -> (i32, i32, i32) {
    %c0_i32 = arith.constant 0 : i32
    %c0_i32_0 = arith.constant 0 : i32
    %c0_i32_1 = arith.constant 0 : i32
    return %arg0, %c0_i32, %c0_i32_0 : i32, i32, i32
  }
}

</mosaic_0001>

<llo_original>
// kernel: fis_forward.1
$region0: #{fis_forward.1}
  #allocation0 [shape = 'u32[]', space=smem, size = 0x4, offset = 0x4, fixed_abs, tag = 'smem constant byte address 0x4 - core index']
  #allocation1 [shape = 'u32[144,128]{1,0:T(1,128)}', space=vmem, size = 0x12000, scoped, tag = 'internal scratch']
  %s0 = inlined_call_operand.vmem [shape: f32[2,4,16], index: 0, kind: input, shape index: {}]
  %s1 = inlined_call_operand.vmem [shape: f32[24,4], index: 1, kind: input, shape index: {}]
  %s2 = inlined_call_operand.vmem [shape: f32[1,8,2], index: 2, kind: output, shape index: {}]
  %s3 = sld [smem:[#allocation0]]
  $region18: #{fis_forward.1} parent=0
    _
  %s5 = ssub.s32 1, %s3
  %s6 = scalar_select 0, %s5, %s3
  // Predicated region
  $region2: #{fis_forward.1} parent=0 // pred_check
    _
  $region3: #{fis_forward.1} parent=0 // pred_check_branch
    %8 = sbr.rel (0) target = $region5
  $region4: #{fis_forward.1} parent=0 // pred_region
    _
  $region5: #{fis_forward.1} parent=0 // pred_fallthru
    _
  // Predicated region
  $region6: #{fis_forward.1} parent=0 // pred_check
    _
  $region7: #{fis_forward.1} parent=0 // pred_check_branch
    %10 = sbr.rel (0) target = $region9
  $region8: #{fis_forward.1} parent=0 // pred_region
    _
  $region9: #{fis_forward.1} parent=0 // pred_fallthru
    _
  %v11 = vld [vmem:[%s0] sm:$0xf]
  %v12 = vld [vmem:[%s0 + $0x4] sm:$0xf]
  %v13 = vld [vmem:[%s1] sm:$0xff]
  %v14 = vld [vmem:[%s1 + $0x8] sm:$0xff]
  %v15 = vld [vmem:[%s1 + $0x10] sm:$0xff]
  %vm16 = vcmask 31744
  %v18 = vsel %vm16, %v13, 0
  %v21 = vsel %vm16, %v14, 0
  %v24 = vsel %vm16, %v15, 0
  %vm26 = vcmask 1043456
  %v28 = vsel %vm26, %v11, 0
  %30 = vmatprep.subr.mxu0 0.0
  %31 = vmatpush1.msra.mxu0 0.0
  %32 = vmatprep.subr.mxu0 0.0
  %33 = vmatpush1.msra.mxu0 0.0
  %34 = vmatprep.subr.mxu0 0.0
  %35 = vmatpush1.msra.mxu0 0.0
  %36 = vmatprep.subr.mxu0 0.0
  %37 = vmatpush1.msra.mxu0 0.0
  %38 = vmatprep.subr.mxu0 0.0
  %39 = vmatpush1.msra.mxu0 0.0
  %40 = vmatprep.subr.mxu0 0.0
  %41 = vmatpush1.msra.mxu0 0.0
  %42 = vmatprep.subr.mxu0 0.0
  %43 = vmatpush1.msra.mxu0 0.0
  %44 = vmatprep.subr.mxu0 0.0
  %45 = vmatpush1.msra.mxu0 0.0
  %46 = vmatprep.subr.mxu0 0.0
  %47 = vmatpush1.msra.mxu0 0.0
  %48 = vmatprep.subr.mxu0 0.0
  %49 = vmatpush1.msra.mxu0 0.0
  %50 = vmatprep.subr.mxu0 0.0
  %51 = vmatpush1.msra.mxu0 0.0
  %52 = vmatprep.subr.mxu0 0.0
  %53 = vmatpush1.msra.mxu0 0.0
  %54 = vmatprep.subr.mxu0 0.0
  %55 = vmatpush1.msra.mxu0 0.0
  %56 = vmatprep.subr.mxu0 0.0
  %57 = vmatpush1.msra.mxu0 0.0
  %58 = vmatprep.subr.mxu0 0.0
  %59 = vmatpush1.msra.mxu0 0.0
  %60 = vmatprep.subr.mxu0 0.0
  %61 = vmatpush1.msra.mxu0 %v28
  %62 = vmatprep.subr.mxu0 0.0
  %63 = vmatpush2.msra.mxu0 0.0
  %64 = vmatprep.subr.mxu0 0.0
  %65 = vmatpush2.msra.mxu0 0.0
  %66 = vmatprep.subr.mxu0 0.0
  %67 = vmatpush2.msra.mxu0 0.0
  %68 = vmatprep.subr.mxu0 0.0
  %69 = vmatpush2.msra.mxu0 0.0
  %70 = vmatprep.subr.mxu0 0.0
  %71 = vmatpush2.msra.mxu0 0.0
  %72 = vmatprep.subr.mxu0 0.0
  %73 = vmatpush2.msra.mxu0 0.0
  %74 = vmatprep.subr.mxu0 0.0
  %75 = vmatpush2.msra.mxu0 0.0
  %76 = vmatprep.subr.mxu0 0.0
  %77 = vmatpush2.msra.mxu0 0.0
  %78 = vmatprep.subr.mxu0 0.0
  %79 = vmatpush2.msra.mxu0 0.0
  %80 = vmatprep.subr.mxu0 0.0
  %81 = vmatpush2.msra.mxu0 0.0
  %82 = vmatprep.subr.mxu0 0.0
  %83 = vmatpush2.msra.mxu0 0.0
  %84 = vmatprep.subr.mxu0 0.0
  %85 = vmatpush2.msra.mxu0 0.0
  %86 = vmatprep.subr.mxu0 0.0
  %87 = vmatpush2.msra.mxu0 0.0
  %88 = vmatprep.subr.mxu0 0.0
  %89 = vmatpush2.msra.mxu0 0.0
  %90 = vmatprep.subr.mxu0 0.0
  %91 = vmatpush2.msra.mxu0 0.0
  %92 = vmatprep.subr.mxu0 0.0
  %93 = vmatpush2.msra.mxu0 0.0
  %94 = vmatprep.mubr.f32.mxu0 0.0
  %95 = vmatmul.mubr.f32.gmra.mxu0 %v18
  %v96 = vpop.f32.mrf.mxu0
  %v97 = vadd.f32 0.0, %v96
  %v98 = vpop.f32.mrf.mxu0
  %99 = vmatprep.mubr.f32.mxu0 0.0
  %100 = vmatmul.mubr.f32.gmra.mxu0 %v21
  %v101 = vpop.f32.mrf.mxu0
  %v102 = vadd.f32 0.0, %v101
  %v103 = vpop.f32.mrf.mxu0
  %104 = vmatprep.mubr.f32.mxu0 0.0
  %105 = vmatmul.mubr.f32.gmra.mxu0 %v24
  %v106 = vpop.f32.mrf.mxu0
  %v107 = vadd.f32 0.0, %v106
  %v108 = vpop.f32.mrf.mxu0
  %109 = vdwg.mxu0
  %v111 = vsel %vm26, %v12, 0
  %113 = vmatprep.subr.mxu0 0.0
  %114 = vmatpush1.msra.mxu0 0.0
  %115 = vmatprep.subr.mxu0 0.0
  %116 = vmatpush1.msra.mxu0 0.0
  %117 = vmatprep.subr.mxu0 0.0
  %118 = vmatpush1.msra.mxu0 0.0
  %119 = vmatprep.subr.mxu0 0.0
  %120 = vmatpush1.msra.mxu0 0.0
  %121 = vmatprep.subr.mxu0 0.0
  %122 = vmatpush1.msra.mxu0 0.0
  %123 = vmatprep.subr.mxu0 0.0
  %124 = vmatpush1.msra.mxu0 0.0
  %125 = vmatprep.subr.mxu0 0.0
  %126 = vmatpush1.msra.mxu0 0.0
  %127 = vmatprep.subr.mxu0 0.0
  %128 = vmatpush1.msra.mxu0 0.0
  %129 = vmatprep.subr.mxu0 0.0
  %130 = vmatpush1.msra.mxu0 0.0
  %131 = vmatprep.subr.mxu0 0.0
  %132 = vmatpush1.msra.mxu0 0.0
  %133 = vmatprep.subr.mxu0 0.0
  %134 = vmatpush1.msra.mxu0 0.0
  %135 = vmatprep.subr.mxu0 0.0
  %136 = vmatpush1.msra.mxu0 0.0
  %137 = vmatprep.subr.mxu0 0.0
  %138 = vmatpush1.msra.mxu0 0.0
  %139 = vmatprep.subr.mxu0 0.0
  %140 = vmatpush1.msra.mxu0 0.0
  %141 = vmatprep.subr.mxu0 0.0
  %142 = vmatpush1.msra.mxu0 0.0
  %143 = vmatprep.subr.mxu0 0.0
  %144 = vmatpush1.msra.mxu0 %v111
  %145 = vmatprep.subr.mxu0 0.0
  %146 = vmatpush2.msra.mxu0 0.0
  %147 = vmatprep.subr.mxu0 0.0
  %148 = vmatpush2.msra.mxu0 0.0
  %149 = vmatprep.subr.mxu0 0.0
  %150 = vmatpush2.msra.mxu0 0.0
  %151 = vmatprep.subr.mxu0 0.0
  %152 = vmatpush2.msra.mxu0 0.0
  %153 = vmatprep.subr.mxu0 0.0
  %154 = vmatpush2.msra.mxu0 0.0
  %155 = vmatprep.subr.mxu0 0.0
  %156 = vmatpush2.msra.mxu0 0.0
  %157 = vmatprep.subr.mxu0 0.0
  %158 = vmatpush2.msra.mxu0 0.0
  %159 = vmatprep.subr.mxu0 0.0
  %160 = vmatpush2.msra.mxu0 0.0
  %161 = vmatprep.subr.mxu0 0.0
  %162 = vmatpush2.msra.mxu0 0.0
  %163 = vmatprep.subr.mxu0 0.0
  %164 = vmatpush2.msra.mxu0 0.0
  %165 = vmatprep.subr.mxu0 0.0
  %166 = vmatpush2.msra.mxu0 0.0
  %167 = vmatprep.subr.mxu0 0.0
  %168 = vmatpush2.msra.mxu0 0.0
  %169 = vmatprep.subr.mxu0 0.0
  %170 = vmatpush2.msra.mxu0 0.0
  %171 = vmatprep.subr.mxu0 0.0
  %172 = vmatpush2.msra.mxu0 0.0
  %173 = vmatprep.subr.mxu0 0.0
  %174 = vmatpush2.msra.mxu0 0.0
  %175 = vmatprep.subr.mxu0 0.0
  %176 = vmatpush2.msra.mxu0 0.0
  %177 = vmatprep.mubr.f32.mxu0 0.0
  %178 = vmatmul.mubr.f32.gmra.mxu0 %v18
  %v179 = vpop.f32.mrf.mxu0
  %v180 = vadd.f32 0.0, %v179
  %v181 = vpop.f32.mrf.mxu0
  %182 = vmatprep.mubr.f32.mxu0 0.0
  %183 = vmatmul.mubr.f32.gmra.mxu0 %v21
  %v184 = vpop.f32.mrf.mxu0
  %v185 = vadd.f32 0.0, %v184
  %v186 = vpop.f32.mrf.mxu0
  %187 = vmatprep.mubr.f32.mxu0 0.0
  %188 = vmatmul.mubr.f32.gmra.mxu0 %v24
  %v189 = vpop.f32.mrf.mxu0
  %v190 = vadd.f32 0.0, %v189
  %v191 = vpop.f32.mrf.mxu0
  %192 = vdwg.mxu0
  %v193 = vlaneseq
  %v194 = vand.u32 %v193, 127
  %vm195 = vcmp.lt.s32.totalorder %v194, 1
  %vm196 = vcmask 1047680
  %197 = vrot.lane.b32.xlu0 %v97, 16
  %v198 = vpop.permute.xlu0 %197
  %v199 = vsel %vm196, %v198, %v97
  %200 = vrot.lane.b32.xlu0 %v180, 16
  %v201 = vpop.permute.xlu0 %200
  %v202 = vsel %vm196, %v201, %v180
  %203 = vrot.lane.b32.xlu0 %v199, 16
  %v204 = vpop.permute.xlu0 %203
  %205 = vrot.lane.b32.xlu0 %v202, 16
  %v206 = vpop.permute.xlu0 %205
  %v207 = vsel %vm196, %v204, %v97
  %v208 = vsel %vm196, %v206, %v180
  %v209 = vsel %vm195, 1, 0
  %vm210 = vcmp.eq.s32.totalorder %v209, 1
  %213 = vrot.lane.b32.xlu0 %v207, 113
  %v214 = vpop.permute.xlu0 %213
  %215 = vrot.lane.b32.xlu0 %v208, 113
  %v216 = vpop.permute.xlu0 %215
  %v219 = vsel %vm210, 0.0, %v214
  %v220 = vsel %vm210, 0.0, %v216
  %221 = vrot.lane.b32.xlu0 %v219, 16
  %v222 = vpop.permute.xlu0 %221
  %v223 = vsel %vm196, %v222, %v219
  %224 = vrot.lane.b32.xlu0 %v220, 16
  %v225 = vpop.permute.xlu0 %224
  %v226 = vsel %vm196, %v225, %v220
  %227 = vrot.lane.b32.xlu0 %v223, 16
  %v228 = vpop.permute.xlu0 %227
  %229 = vrot.lane.b32.xlu0 %v226, 16
  %v230 = vpop.permute.xlu0 %229
  %v231 = vsel %vm196, %v228, %v219
  %v232 = vsel %vm196, %v230, %v220
  %235 = vrot.lane.b32.xlu0 %v231, 113
  %v236 = vpop.permute.xlu0 %235
  %237 = vrot.lane.b32.xlu0 %v232, 113
  %v238 = vpop.permute.xlu0 %237
  %v241 = vsel %vm210, 0.0, %v236
  %v242 = vsel %vm210, 0.0, %v238
  %v243 = vadd.f32 %v219, %v241
  %v244 = vadd.f32 %v220, %v242
  %vm245 = vcmp.lt.s32.totalorder %v194, 2
  %246 = vrot.lane.b32.xlu0 %v243, 16
  %v247 = vpop.permute.xlu0 %246
  %v248 = vsel %vm196, %v247, %v243
  %249 = vrot.lane.b32.xlu0 %v244, 16
  %v250 = vpop.permute.xlu0 %249
  %v251 = vsel %vm196, %v250, %v244
  %252 = vrot.lane.b32.xlu0 %v248, 16
  %v253 = vpop.permute.xlu0 %252
  %254 = vrot.lane.b32.xlu0 %v251, 16
  %v255 = vpop.permute.xlu0 %254
  %v256 = vsel %vm196, %v253, %v243
  %v257 = vsel %vm196, %v255, %v244
  %v258 = vsel %vm245, 1, 0
  %vm259 = vcmp.eq.s32.totalorder %v258, 1
  %262 = vrot.lane.b32.xlu0 %v256, 114
  %v263 = vpop.permute.xlu0 %262
  %264 = vrot.lane.b32.xlu0 %v257, 114
  %v265 = vpop.permute.xlu0 %264
  %v268 = vsel %vm259, 0.0, %v263
  %v269 = vsel %vm259, 0.0, %v265
  %v270 = vadd.f32 %v243, %v268
  %v271 = vadd.f32 %v244, %v269
  %vm272 = vcmp.lt.s32.totalorder %v194, 4
  %273 = vrot.lane.b32.xlu0 %v270, 16
  %v274 = vpop.permute.xlu0 %273
  %v275 = vsel %vm196, %v274, %v270
  %276 = vrot.lane.b32.xlu0 %v271, 16
  %v277 = vpop.permute.xlu0 %276
  %v278 = vsel %vm196, %v277, %v271
  %279 = vrot.lane.b32.xlu0 %v275, 16
  %v280 = vpop.permute.xlu0 %279
  %281 = vrot.lane.b32.xlu0 %v278, 16
  %v282 = vpop.permute.xlu0 %281
  %v283 = vsel %vm196, %v280, %v270
  %v284 = vsel %vm196, %v282, %v271
  %v285 = vsel %vm272, 1, 0
  %vm286 = vcmp.eq.s32.totalorder %v285, 1
  %289 = vrot.lane.b32.xlu0 %v283, 116
  %v290 = vpop.permute.xlu0 %289
  %291 = vrot.lane.b32.xlu0 %v284, 116
  %v292 = vpop.permute.xlu0 %291
  %v295 = vsel %vm286, 0.0, %v290
  %v296 = vsel %vm286, 0.0, %v292
  %v297 = vadd.f32 %v270, %v295
  %v298 = vadd.f32 %v271, %v296
  %vm299 = vcmp.lt.s32.totalorder %v194, 8
  %300 = vrot.lane.b32.xlu0 %v297, 16
  %v301 = vpop.permute.xlu0 %300
  %v302 = vsel %vm196, %v301, %v297
  %303 = vrot.lane.b32.xlu0 %v298, 16
  %v304 = vpop.permute.xlu0 %303
  %v305 = vsel %vm196, %v304, %v298
  %306 = vrot.lane.b32.xlu0 %v302, 16
  %v307 = vpop.permute.xlu0 %306
  %308 = vrot.lane.b32.xlu0 %v305, 16
  %v309 = vpop.permute.xlu0 %308
  %v310 = vsel %vm196, %v307, %v297
  %v311 = vsel %vm196, %v309, %v298
  %v312 = vsel %vm299, 1, 0
  %vm313 = vcmp.eq.s32.totalorder %v312, 1
  %316 = vrot.lane.b32.xlu0 %v310, 120
  %v317 = vpop.permute.xlu0 %316
  %318 = vrot.lane.b32.xlu0 %v311, 120
  %v319 = vpop.permute.xlu0 %318
  %v322 = vsel %vm313, 0.0, %v317
  %v323 = vsel %vm313, 0.0, %v319
  %v324 = vadd.f32 %v297, %v322
  %v325 = vadd.f32 %v298, %v323
  %v326 = vmul.f32 %v102, %v324
  %v327 = vmul.f32 %v185, %v325
  %328 = vrot.lane.b32.xlu0 %v326, 16
  %v329 = vpop.permute.xlu0 %328
  %v330 = vsel %vm196, %v329, %v326
  %331 = vrot.lane.b32.xlu0 %v327, 16
  %v332 = vpop.permute.xlu0 %331
  %v333 = vsel %vm196, %v332, %v327
  %334 = vrot.lane.b32.xlu0 %v330, 16
  %v335 = vpop.permute.xlu0 %334
  %336 = vrot.lane.b32.xlu0 %v333, 16
  %v337 = vpop.permute.xlu0 %336
  %v338 = vsel %vm196, %v335, %v326
  %v339 = vsel %vm196, %v337, %v327
  %342 = vrot.lane.b32.xlu0 %v338, 113
  %v343 = vpop.permute.xlu0 %342
  %344 = vrot.lane.b32.xlu0 %v339, 113
  %v345 = vpop.permute.xlu0 %344
  %v348 = vsel %vm210, 0.0, %v343
  %v349 = vsel %vm210, 0.0, %v345
  %350 = vrot.lane.b32.xlu0 %v348, 16
  %v351 = vpop.permute.xlu0 %350
  %v352 = vsel %vm196, %v351, %v348
  %353 = vrot.lane.b32.xlu0 %v349, 16
  %v354 = vpop.permute.xlu0 %353
  %v355 = vsel %vm196, %v354, %v349
  %356 = vrot.lane.b32.xlu0 %v352, 16
  %v357 = vpop.permute.xlu0 %356
  %358 = vrot.lane.b32.xlu0 %v355, 16
  %v359 = vpop.permute.xlu0 %358
  %v360 = vsel %vm196, %v357, %v348
  %v361 = vsel %vm196, %v359, %v349
  %364 = vrot.lane.b32.xlu0 %v360, 113
  %v365 = vpop.permute.xlu0 %364
  %366 = vrot.lane.b32.xlu0 %v361, 113
  %v367 = vpop.permute.xlu0 %366
  %v370 = vsel %vm210, 0.0, %v365
  %v371 = vsel %vm210, 0.0, %v367
  %v372 = vadd.f32 %v348, %v370
  %v373 = vadd.f32 %v349, %v371
  %374 = vrot.lane.b32.xlu0 %v372, 16
  %v375 = vpop.permute.xlu0 %374
  %v376 = vsel %vm196, %v375, %v372
  %377 = vrot.lane.b32.xlu0 %v373, 16
  %v378 = vpop.permute.xlu0 %377
  %v379 = vsel %vm196, %v378, %v373
  %380 = vrot.lane.b32.xlu0 %v376, 16
  %v381 = vpop.permute.xlu0 %380
  %382 = vrot.lane.b32.xlu0 %v379, 16
  %v383 = vpop.permute.xlu0 %382
  %v384 = vsel %vm196, %v381, %v372
  %v385 = vsel %vm196, %v383, %v373
  %388 = vrot.lane.b32.xlu0 %v384, 114
  %v389 = vpop.permute.xlu0 %388
  %390 = vrot.lane.b32.xlu0 %v385, 114
  %v391 = vpop.permute.xlu0 %390
  %v394 = vsel %vm259, 0.0, %v389
  %v395 = vsel %vm259, 0.0, %v391
  %v396 = vadd.f32 %v372, %v394
  %v397 = vadd.f32 %v373, %v395
  %398 = vrot.lane.b32.xlu0 %v396, 16
  %v399 = vpop.permute.xlu0 %398
  %v400 = vsel %vm196, %v399, %v396
  %401 = vrot.lane.b32.xlu0 %v397, 16
  %v402 = vpop.permute.xlu0 %401
  %v403 = vsel %vm196, %v402, %v397
  %404 = vrot.lane.b32.xlu0 %v400, 16
  %v405 = vpop.permute.xlu0 %404
  %406 = vrot.lane.b32.xlu0 %v403, 16
  %v407 = vpop.permute.xlu0 %406
  %v408 = vsel %vm196, %v405, %v396
  %v409 = vsel %vm196, %v407, %v397
  %412 = vrot.lane.b32.xlu0 %v408, 116
  %v413 = vpop.permute.xlu0 %412
  %414 = vrot.lane.b32.xlu0 %v409, 116
  %v415 = vpop.permute.xlu0 %414
  %v418 = vsel %vm286, 0.0, %v413
  %v419 = vsel %vm286, 0.0, %v415
  %v420 = vadd.f32 %v396, %v418
  %v421 = vadd.f32 %v397, %v419
  %422 = vrot.lane.b32.xlu0 %v420, 16
  %v423 = vpop.permute.xlu0 %422
  %v424 = vsel %vm196, %v423, %v420
  %425 = vrot.lane.b32.xlu0 %v421, 16
  %v426 = vpop.permute.xlu0 %425
  %v427 = vsel %vm196, %v426, %v421
  %428 = vrot.lane.b32.xlu0 %v424, 16
  %v429 = vpop.permute.xlu0 %428
  %430 = vrot.lane.b32.xlu0 %v427, 16
  %v431 = vpop.permute.xlu0 %430
  %v432 = vsel %vm196, %v429, %v420
  %v433 = vsel %vm196, %v431, %v421
  %436 = vrot.lane.b32.xlu0 %v432, 120
  %v437 = vpop.permute.xlu0 %436
  %438 = vrot.lane.b32.xlu0 %v433, 120
  %v439 = vpop.permute.xlu0 %438
  %v442 = vsel %vm313, 0.0, %v437
  %v443 = vsel %vm313, 0.0, %v439
  %v444 = vadd.f32 %v420, %v442
  %v445 = vadd.f32 %v421, %v443
  %v446 = vmul.f32 %v107, %v444
  %v447 = vmul.f32 %v190, %v445
  %vm448 = vcmask 130048
  %v449 = vsel %vm448, %v446, 0.0
  %450 = vadd.xlane.f32.xlu0 %v449
  %v451 = vpop.xlane.xlu0 %450
  %v452 = vsel %vm448, %v447, 0.0
  %453 = vadd.xlane.f32.xlu0 %v452
  %v454 = vpop.xlane.xlu0 %453
  %v457 = vlaneseq
  %v458 = vshrl.u32 %v457, 7
  %v459 = vsub.s32 %v194, %v458
  %v460 = vrot.slane %v451, %v459
  %v461 = vlaneseq
  %v462 = vshrl.u32 %v461, 7
  %v463 = vsub.s32 %v194, %v462
  %v464 = vrot.slane %v454, %v463
  %vm465 = vcmask 1041409
  %v466 = vsel %vm465, %v464, %v460
  %468 = vxpose.xlu0.b32.start [1/16] %v466, 128
  %469 = vxpose.xlu0.b32.cont [2/16] 0.0, 128
  %470 = vxpose.xlu0.b32.cont [3/16] 0.0, 128
  %471 = vxpose.xlu0.b32.cont [4/16] 0.0, 128
  %472 = vxpose.xlu0.b32.cont [5/16] 0.0, 128
  %473 = vxpose.xlu0.b32.cont [6/16] 0.0, 128
  %474 = vxpose.xlu0.b32.cont [7/16] 0.0, 128
  %475 = vxpose.xlu0.b32.cont [8/16] 0.0, 128
  %476 = vxpose.xlu0.b32.cont [9/16] 0.0, 128
  %477 = vxpose.xlu0.b32.cont [10/16] 0.0, 128
  %478 = vxpose.xlu0.b32.cont [11/16] 0.0, 128
  %479 = vxpose.xlu0.b32.cont [12/16] 0.0, 128
  %480 = vxpose.xlu0.b32.cont [13/16] 0.0, 128
  %481 = vxpose.xlu0.b32.cont [14/16] 0.0, 128
  %482 = vxpose.xlu0.b32.cont [15/16] 0.0, 128
  %483 = vxpose.xlu0.b32.end [16/16] 0.0, 128
  %v484 = vpop.trf.xlu0
  %v485 = vpop.trf.xlu0
  %v486 = vpop.trf.xlu0
  %v487 = vpop.trf.xlu0
  %v488 = vpop.trf.xlu0
  %v489 = vpop.trf.xlu0
  %v490 = vpop.trf.xlu0
  %v491 = vpop.trf.xlu0
  %v492 = vpop.trf.xlu0
  %v493 = vpop.trf.xlu0
  %v494 = vpop.trf.xlu0
  %v495 = vpop.trf.xlu0
  %v496 = vpop.trf.xlu0
  %v497 = vpop.trf.xlu0
  %v498 = vpop.trf.xlu0
  %v499 = vpop.trf.xlu0
  %vm500 = vcmask 15360
  %501 = vst.msk [vmem:[%s2] sm:$0xff] %vm500, %v484
  // Predicated region
  $region10: #{fis_forward.1} parent=0 // pred_check
    _
  $region11: #{fis_forward.1} parent=0 // pred_check_branch
    %503 = sbr.rel (0) target = $region13
  $region12: #{fis_forward.1} parent=0 // pred_region
    _
  $region13: #{fis_forward.1} parent=0 // pred_fallthru
    _
  // Predicated region
  $region14: #{fis_forward.1} parent=0 // pred_check
    _
  $region15: #{fis_forward.1} parent=0 // pred_check_branch
    %505 = sbr.rel (0) target = $region17
  $region16: #{fis_forward.1} parent=0 // pred_region
    _
  $region17: #{fis_forward.1} parent=0 // pred_fallthru
    _

</llo_original>
